<compile_context>
chip_gen: v7x
topology: tpu7x:2x2x1
jax: 0.10.0
libtpu: 0.0.40
codegen_flags: <defaults>
</compile_context>

<pallas_src>
import jax
import jax.numpy as jnp
from jax import lax
from jax.experimental import pallas as pl
from jax.experimental.pallas import tpu as pltpu

EPS = 1e-5
NUM_SHARDS = 2   # leading "parallel" grid axis of the encoder reduction


def _vmem_limit(*buffer_bytes):
    """Scoped-VMEM limit: double-buffered pipeline buffers + headroom."""
    need = sum(2 * b for b in buffer_bytes)
    return int(max(need + (8 << 20), 16 << 20))


# --------------------------------------------------------------------------
# Pass 1: per-shard encoder partial sums over K-tiles (accumulate in output).
# --------------------------------------------------------------------------
def _encode_kernel(x_ref, w_en_ref, part_ref):
    k = pl.program_id(1)

    @pl.when(k == 0)
    def _():
        part_ref[...] = jnp.zeros_like(part_ref)

    # bf16 x-tile @ bf16 weight-tile on the MXU, f32 accumulation into the
    # resident (1, 1, H) output block for this shard.
    part_ref[...] += jnp.dot(
        x_ref[...], w_en_ref[...],
        preferred_element_type=jnp.float32)[None]          # (1, 1, H) f32


# --------------------------------------------------------------------------
# Pass 2: decoder over N-tiles: out = relu(z @ W_de + b_de)
# --------------------------------------------------------------------------
def _decode_kernel(z_ref, w_de_ref, b_de_ref, o_ref):
    d = jnp.dot(z_ref[...], w_de_ref[...],
                preferred_element_type=jnp.float32) + b_de_ref[...]  # (1, TN)
    o_ref[...] = jnp.maximum(d, 0.0)


def autoencoder_forward(x, w_en, b_en, w_de, b_de, *, tk=32768, tn=32768):
    """x: any shape with exactly D = w_en.shape[0] elements (batch == 1)."""
    D, H = w_en.shape
    nc = NUM_SHARDS
    tk = min(tk, D // nc)
    tn = min(tn, D)
    assert D % (nc * tk) == 0 and D % tn == 0, (D, nc, tk, tn)
    assert tk % 128 == 0 and tn % 128 == 0, (tk, tn)
    kps = D // (nc * tk)                      # K steps per shard

    # Stream everything wide as bf16 (halves HBM bytes on this bandwidth-bound
    # kernel); accumulation and statistics stay f32.
    x_bf = x.reshape(1, D).astype(jnp.bfloat16)
    w_en_bf = w_en.astype(jnp.bfloat16)
    w_de_bf = w_de.astype(jnp.bfloat16)
    b_de2 = b_de.reshape(1, D).astype(jnp.float32)

    # ---- pass 1: encoder partial sums, sharded over NUM_SHARDS x K-tiles ----
    partial = pl.pallas_call(
        _encode_kernel,
        out_shape=jax.ShapeDtypeStruct((nc, 1, H), jnp.float32),
        grid=(nc, kps),
        in_specs=[
            pl.BlockSpec((1, tk), lambda c, k: (0, c * kps + k)),   # x tile
            pl.BlockSpec((tk, H), lambda c, k: (c * kps + k, 0)),   # W_en tile
        ],
        out_specs=pl.BlockSpec((1, 1, H), lambda c, k: (c, 0, 0)),  # resident
        compiler_params=pltpu.CompilerParams(
            dimension_semantics=("parallel", "arbitrary"),
            vmem_limit_bytes=_vmem_limit(tk * 2, tk * H * 2, H * 4)),
        cost_estimate=pl.CostEstimate(
            flops=2 * D * H,
            transcendentals=0,
            bytes_accessed=D * H * 2 + D * 2 + nc * H * 4),
    )(x_bf, w_en_bf)

    # ---- tiny epilogue (128 floats) in plain JAX: bias + InstanceNorm1d +
    # ReLU.  Keeping it out of the kernel is what allows the K reduction to be
    # sharded across both v7x TensorCores.
    e = jnp.sum(partial[:, 0, :], axis=0, keepdims=True) + \
        b_en.reshape(1, H).astype(jnp.float32)
    mean = jnp.mean(e, axis=-1, keepdims=True)
    diff = e - mean
    var = jnp.mean(diff * diff, axis=-1, keepdims=True)      # biased variance
    z = jnp.maximum(diff * lax.rsqrt(var + EPS), 0.0)
    z_bf = z.astype(jnp.bfloat16)

    # ---- pass 2: decoder (independent over output columns; "parallel" lets
    # v7x shard the N tiles across its two TensorCores) ----
    out_flat = pl.pallas_call(
        _decode_kernel,
        out_shape=jax.ShapeDtypeStruct((1, D), jnp.float32),
        grid=(D // tn,),
        in_specs=[
            pl.BlockSpec((1, H), lambda j: (0, 0)),     # z (whole, tiny)
            pl.BlockSpec((H, tn), lambda j: (0, j)),    # W_de tile (bf16)
            pl.BlockSpec((1, tn), lambda j: (0, j)),    # b_de tile
        ],
        out_specs=pl.BlockSpec((1, tn), lambda j: (0, j)),   # lane-dense out
        compiler_params=pltpu.CompilerParams(
            dimension_semantics=("parallel",),
            vmem_limit_bytes=_vmem_limit(H * 2, tn * H * 2, tn * 4, tn * 4)),
        cost_estimate=pl.CostEstimate(
            flops=2 * D * H,
            transcendentals=0,
            bytes_accessed=D * H * 2 + 2 * D * 4 + H * 2),
    )(z_bf, w_de_bf, b_de2)

    S = round(D ** (1.0 / 3.0))
    return out_flat.reshape(S, S, S)


# --------------------------------------------------------------------------
# Pure-JAX reference (same bf16 rounding of matmul inputs, f32 accumulation)
# --------------------------------------------------------------------------
def reference_forward(x, w_en, b_en, w_de, b_de):
    D, H = w_en.shape
    xr = x.reshape(1, D).astype(jnp.bfloat16).astype(jnp.float32)
    w_en_r = w_en.astype(jnp.bfloat16).astype(jnp.float32)
    w_de_r = w_de.astype(jnp.bfloat16).astype(jnp.float32)
    e = xr @ w_en_r + b_en.reshape(1, H)
    mean = jnp.mean(e, axis=-1, keepdims=True)
    var = jnp.mean((e - mean) ** 2, axis=-1, keepdims=True)
    z = jnp.maximum((e - mean) * lax.rsqrt(var + EPS), 0.0)
    zr = z.astype(jnp.bfloat16).astype(jnp.float32)
    d = zr @ w_de_r + b_de.reshape(1, D)
    out = jnp.maximum(d, 0.0)
    S = round(D ** (1.0 / 3.0))
    return out.reshape(S, S, S)


def init_params(key, D, H):
    """Deterministic init mirroring torch.nn.Linear default U(-1/sqrt(fan_in), ...)."""
    k1, k2, k3, k4 = jax.random.split(key, 4)
    bound_en = 1.0 / (D ** 0.5)
    bound_de = 1.0 / (H ** 0.5)
    w_en = jax.random.uniform(k1, (D, H), jnp.float32, -bound_en, bound_en)
    b_en = jax.random.uniform(k2, (H,), jnp.float32, -bound_en, bound_en)
    w_de = jax.random.uniform(k3, (H, D), jnp.float32, -bound_de, bound_de)
    b_de = jax.random.uniform(k4, (D,), jnp.float32, -bound_de, bound_de)
    return w_en, b_en, w_de, b_de


if __name__ == "__main__":
    # Small shapes consistent with the module: spatial S=16 -> D = 16^3 = 4096,
    # hidden H = 128 (same as the reference out_channels), batch = 1.
    S = 16
    D = S * S * S
    H = 128

    key = jax.random.PRNGKey(0)
    k_x, k_p = jax.random.split(key)
    x = jax.random.normal(k_x, (1, S, S, S), jnp.float32)   # flattened inside
    w_en, b_en, w_de, b_de = init_params(k_p, D, H)

    ref = reference_forward(x, w_en, b_en, w_de, b_de)

    # Production-style config: large default tiles (automatically capped to
    # this small demo shape).
    out = autoencoder_forward(x, w_en, b_en, w_de, b_de)
    jax.block_until_ready(out)
    assert out.shape == (S, S, S)
    assert jnp.allclose(out, ref, rtol=2e-2, atol=2e-2), (
        float(jnp.max(jnp.abs(out - ref))))

    # Small-tile config purely to exercise the multi-step K-reduction /
    # N-tiling / pipelining code paths at this tiny demo shape (production
    # shapes use the large defaults above; this is a correctness check only).
    out_small = autoencoder_forward(x, w_en, b_en, w_de, b_de, tk=512, tn=512)
    jax.block_until_ready(out_small)
    assert jnp.allclose(out_small, ref, rtol=2e-2, atol=2e-2), (
        float(jnp.max(jnp.abs(out_small - ref))))

    print("KERNEL_OK")
</pallas_src>

<mosaic_0001>
module attributes {stable_mosaic.version = 11 : i64} {
  func.func @_encode_kernel(%arg0: i32, %arg1: i32, %arg2: memref<1x2048xbf16, #tpu.memory_space<vmem>>, %arg3: memref<2048x128xbf16, #tpu.memory_space<vmem>>, %arg4: memref<1x1x128xf32, #tpu.memory_space<vmem>>) attributes {dimension_semantics = [#tpu.dimension_semantics<parallel>, #tpu.dimension_semantics<arbitrary>], iteration_bounds = array<i64: 2, 1>, scalar_prefetch = 0 : i64, scratch_operands = 0 : i64, tpu.core_type = #tpu.core_type<tc>, window_params = [{transform_indices = @transform_0, window_bounds = array<i64: 1, 2048>}, {transform_indices = @transform_1, window_bounds = array<i64: 2048, 128>}, {transform_indices = @transform_2, window_bounds = array<i64: 1, 1, 128>}]} {
    %c0_i32 = arith.constant 0 : i32
    %0 = arith.cmpi eq, %arg1, %c0_i32 : i32
    %1 = arith.extui %0 : i1 to i32
    %c0_i32_0 = arith.constant 0 : i32
    %2 = arith.cmpi ne, %1, %c0_i32_0 : i32
    scf.if %2 {
      %cst_10 = arith.constant 0.000000e+00 : f32
      %10 = vector.broadcast %cst_10 : f32 to vector<1x1x128xf32>
      %c0_11 = arith.constant 0 : index
      %c0_12 = arith.constant 0 : index
      %c0_13 = arith.constant 0 : index
      %11 = vector.load %arg4[%c0_11, %c0_12, %c0_13] : memref<1x1x128xf32, #tpu.memory_space<vmem>>, vector<1x1x128xf32>
      tpu.vector_store %arg4[%c0_11, %c0_12, %c0_13], %10 {strides = array<i32>} : memref<1x1x128xf32, #tpu.memory_space<vmem>>, vector<1x1x128xf32>,
    } else {
    }
    %c0 = arith.constant 0 : index
    %c0_1 = arith.constant 0 : index
    %c0_2 = arith.constant 0 : index
    %3 = vector.load %arg4[%c0, %c0_1, %c0_2] : memref<1x1x128xf32, #tpu.memory_space<vmem>>, vector<1x1x128xf32>
    %c0_3 = arith.constant 0 : index
    %c0_4 = arith.constant 0 : index
    %4 = vector.load %arg2[%c0_3, %c0_4] : memref<1x2048xbf16, #tpu.memory_space<vmem>>, vector<1x2048xbf16>
    %c0_5 = arith.constant 0 : index
    %c0_6 = arith.constant 0 : index
    %5 = vector.load %arg3[%c0_5, %c0_6] : memref<2048x128xbf16, #tpu.memory_space<vmem>>, vector<2048x128xbf16>
    %cst = arith.constant dense<0.000000e+00> : vector<1x128xf32>
    %6 = tpu.matmul %4, %5, %cst {dimension_numbers = #tpu.dot_dimension_numbers<[1], [0], [0], [1], [0, 0, 1, 1], [], []>} : vector<1x2048xbf16>, vector<2048x128xbf16>, vector<1x128xf32> -> vector<1x128xf32>
    %7 = vector.shape_cast %6 : vector<1x128xf32> to vector<1x1x128xf32>
    %8 = arith.addf %3, %7 : vector<1x1x128xf32>
    %c0_7 = arith.constant 0 : index
    %c0_8 = arith.constant 0 : index
    %c0_9 = arith.constant 0 : index
    %9 = vector.load %arg4[%c0_7, %c0_8, %c0_9] : memref<1x1x128xf32, #tpu.memory_space<vmem>>, vector<1x1x128xf32>
    tpu.vector_store %arg4[%c0_7, %c0_8, %c0_9], %8 {strides = array<i32>} : memref<1x1x128xf32, #tpu.memory_space<vmem>>, vector<1x1x128xf32>,
    return
  }
  func.func @transform_0(%arg0: i32, %arg1: i32) -> (i32, i32) {
    %c1_i32 = arith.constant 1 : i32
    %0 = arith.muli %arg0, %c1_i32 : i32
    %1 = arith.addi %0, %arg1 : i32
    %c0_i32 = arith.constant 0 : i32
    %c0_i32_0 = arith.constant 0 : i32
    return %c0_i32, %1 : i32, i32
  }
  func.func @transform_1(%arg0: i32, %arg1: i32) -> (i32, i32) {
    %c1_i32 = arith.constant 1 : i32
    %0 = arith.muli %arg0, %c1_i32 : i32
    %1 = arith.addi %0, %arg1 : i32
    %c0_i32 = arith.constant 0 : i32
    %c0_i32_0 = arith.constant 0 : i32
    return %1, %c0_i32 : i32, i32
  }
  func.func @transform_2(%arg0: i32, %arg1: i32) -> (i32, i32, i32) {
    %c0_i32 = arith.constant 0 : i32
    %c0_i32_0 = arith.constant 0 : i32
    %c0_i32_1 = arith.constant 0 : i32
    return %arg0, %c0_i32, %c0_i32_0 : i32, i32, i32
  }
}

</mosaic_0001>

<llo_original>
// kernel: tpu_custom_call.1
$region0: #{tpu_custom_call.1}
  #allocation0 [shape = 'u32[]', space=smem, size = 0x4, offset = 0x4, fixed_abs, tag = 'smem constant byte address 0x4 - core index']
  #allocation1 [shape = 'u32[144,128]{1,0:T(1,128)}', space=vmem, size = 0x12000, scoped, tag = 'internal scratch']
  %s0 = inlined_call_operand.hbm [shape: bf16[1,4096], index: 0, kind: input, shape index: {}]
  %s1 = inlined_call_operand.hbm [shape: bf16[4096,128], index: 1, kind: input, shape index: {}]
  %s2 = inlined_call_operand.hbm [shape: f32[2,1,128], index: 2, kind: output, shape index: {}]
  %s3 = sld [smem:[#allocation0]]
  $region53: #{tpu_custom_call.1} parent=0
    _
  %s5 = ssub.s32 1, %s3
  %s6 = scalar_select 0, %s5, %s3
  $region1: #{tpu_custom_call.1} parent=0
    #allocation2 [shape = 'u8[16384]{0}', space=vmem, size = 0x4000, scoped, tag = 'input window, operand 0']
    #allocation3 [shape = 's32[2]{0}', space=sflag, size = 0x8, scoped, tag = 'scoped memory for tpu_custom_call.1']
    #allocation4 [shape = 's32[2]{0}', space=sflag, size = 0x8, scoped, tag = 'scoped memory for tpu_custom_call.1']
    #allocation5 [shape = 'u8[1048576]{0}', space=vmem, size = 0x100000, scoped, tag = 'input window, operand 1']
    #allocation6 [shape = 's32[2]{0}', space=sflag, size = 0x8, scoped, tag = 'scoped memory for tpu_custom_call.1']
    #allocation7 [shape = 'u8[1024]{0}', space=vmem, size = 0x400, scoped, tag = 'output window, operand 0']
    %7 = vsyncpa [#allocation3], 0
    %s8 = scalar_lea.sflag [#allocation3], 1
    %9 = vsyncpa %s8, 0
    %10 = vsyncpa [#allocation6], 0
    %s11 = scalar_lea.sflag [#allocation6], 1
    %12 = vsyncpa %s11, 0
    %13 = vsyncpa [#allocation4], 0
    %s14 = scalar_lea.sflag [#allocation4], 1
    %15 = vsyncpa %s14, 0
    loop: start=0, step=1, limit=4
    $region2: #{tpu_custom_call.1} parent=1 // loop_pre_header
      _
    $region3: #{tpu_custom_call.1} parent=1 // loop_header
      %s17 = sphi 0, %s21
      %p18 = scmp.ge.s32.totalorder %s17, 4
      %s24 = sphi 0, %s36
      %s25 = sphi 0, %s32
      %s26 = sphi 0, %s24
      %s27 = sphi 0, %s25
      %s28 = sphi 0, %s26
      %s29 = sphi 0, %s27
      %s41 = sphi 0, %s43
      %s44 = sphi 0, %s41
      %s45 = sphi 0, %s44
      %s61 = sphi 0, %s45
      %s69 = sphi 0, %s71
      %s72 = sphi 0, %s69
      %s73 = sphi 0, %s72
      %s89 = sphi 0, %s73
      %s95 = sphi 0, %s97
      %s98 = sphi 0, %s95
      %s99 = sphi 0, %s98
      %s115 = sphi 0, %s99
    $region4: #{tpu_custom_call.1} parent=1 // loop_header_branch
      %20 = sbr.rel (%p18) target = $region8
    $region5: #{tpu_custom_call.1} parent=1 // loop_body
      %s22 = ssub.s32 %s17, 1
      %s23 = ssub.s32 %s17, 2
      %s30 = sadd.s32 1, %s25
      %p31 = scmp.ge.s32.totalorder %s30, 1
      %s32 = scalar_select %p31, 0, %s30
      %s33 = sadd.s32 1, %s24
      %s34 = scalar_select %p31, %s33, %s24
      %p35 = scmp.ge.s32.totalorder %s34, 2
      %s36 = scalar_select %p35, 0, %s34
      %s37 = sadd.s32 %s24, %s25
      %s38 = sadd.s32 %s36, %s32
      %s39 = ssub.s32 %s37, %s38
      %p40 = scmp.eq.s32.totalorder %s39, 0
      %s42 = sadd.s32 %s41, 1
      %s43 = scalar_select %p40, %s41, %s42
      %p46 = pneg %p40
      %p47 = scmp.eq.s32.totalorder %s17, 1
      %p48 = por %p46, %p47
      %p49 = scmp.ne.s32.totalorder %s41, %s44
      %p50 = scmp.eq.s32.totalorder %s17, 0
      %p51 = por %p49, %p50
      %p52 = scmp.ne.s32.totalorder %s41, %s44
      %p53 = scmp.eq.s32.totalorder %s22, 1
      %p54 = por %p52, %p53
      %p55 = scmp.ne.s32.totalorder %s44, %s45
      %p56 = scmp.eq.s32.totalorder %s22, 0
      %p57 = por %p55, %p56
      %p58 = scmp.ne.s32.totalorder %s44, %s45
      %p59 = scmp.eq.s32.totalorder %s23, 1
      %p60 = por %p58, %p59
      %p62 = scmp.ne.s32.totalorder %s45, %s61
      %p63 = scmp.eq.s32.totalorder %s23, 0
      %p64 = por %p62, %p63
      %s65 = sadd.s32 %s24, %s25
      %s66 = sadd.s32 %s36, %s32
      %s67 = ssub.s32 %s65, %s66
      %p68 = scmp.eq.s32.totalorder %s67, 0
      %s70 = sadd.s32 %s69, 1
      %s71 = scalar_select %p68, %s69, %s70
      %p74 = pneg %p68
      %p75 = scmp.eq.s32.totalorder %s17, 1
      %p76 = por %p74, %p75
      %p77 = scmp.ne.s32.totalorder %s69, %s72
      %p78 = scmp.eq.s32.totalorder %s17, 0
      %p79 = por %p77, %p78
      %p80 = scmp.ne.s32.totalorder %s69, %s72
      %p81 = scmp.eq.s32.totalorder %s22, 1
      %p82 = por %p80, %p81
      %p83 = scmp.ne.s32.totalorder %s72, %s73
      %p84 = scmp.eq.s32.totalorder %s22, 0
      %p85 = por %p83, %p84
      %p86 = scmp.ne.s32.totalorder %s72, %s73
      %p87 = scmp.eq.s32.totalorder %s23, 1
      %p88 = por %p86, %p87
      %p90 = scmp.ne.s32.totalorder %s73, %s89
      %p91 = scmp.eq.s32.totalorder %s23, 0
      %p92 = por %p90, %p91
      %s93 = ssub.s32 %s24, %s36
      %p94 = scmp.eq.s32.totalorder %s93, 0
      %s96 = sadd.s32 %s95, 1
      %s97 = scalar_select %p94, %s95, %s96
      %p100 = pneg %p94
      %p101 = scmp.eq.s32.totalorder %s17, 1
      %p102 = por %p100, %p101
      %p103 = scmp.ne.s32.totalorder %s95, %s98
      %p104 = scmp.eq.s32.totalorder %s17, 0
      %p105 = por %p103, %p104
      %p106 = scmp.ne.s32.totalorder %s95, %s98
      %p107 = scmp.eq.s32.totalorder %s22, 1
      %p108 = por %p106, %p107
      %p109 = scmp.ne.s32.totalorder %s98, %s99
      %p110 = scmp.eq.s32.totalorder %s22, 0
      %p111 = por %p109, %p110
      %p112 = scmp.ne.s32.totalorder %s98, %s99
      %p113 = scmp.eq.s32.totalorder %s23, 1
      %p114 = por %p112, %p113
      %p116 = scmp.ne.s32.totalorder %s99, %s115
      %p117 = scmp.eq.s32.totalorder %s23, 0
      %p118 = por %p116, %p117
      %p119 = scmp.le.s32.totalorder 1, %s17
      %p120 = scmp.lt.s32.totalorder %s17, 3
      %p121 = pnand %p119, %p120
      %p122 = pneg %p121
      // Predicated region
      $region9: #{tpu_custom_call.1} parent=5 // pred_check
        _
      $region10: #{tpu_custom_call.1} parent=5 // pred_check_branch
        %124 = sbr.rel (%p121) target = $region12
      $region11: #{tpu_custom_call.1} parent=5 // pred_region
        %s125 = ssub.s32 %s17, 1
      $region12: #{tpu_custom_call.1} parent=5 // pred_fallthru
        _
      %p126 = scmp.lt.s32.totalorder %s17, 2
      // Predicated region
      $region13: #{tpu_custom_call.1} parent=5 // pred_check
        %p127 = pneg %p126
      $region14: #{tpu_custom_call.1} parent=5 // pred_check_branch
        %129 = sbr.rel (%p127) target = $region16
      $region15: #{tpu_custom_call.1} parent=5 // pred_region
        // Predicated region
        $region17: #{tpu_custom_call.1} parent=15 // pred_check
          %p130 = pneg %p51
        $region18: #{tpu_custom_call.1} parent=15 // pred_check_branch
          %132 = sbr.rel (%p130) target = $region20
        $region19: #{tpu_custom_call.1} parent=15 // pred_region
          %s133 = sand.u32 %s41, 1
          %s134 = scalar_lea.sflag [#allocation3], %s133
          %s135 = sand.u32 %s41, 1
          %s136 = smul.addr %s135, 16
          %s137 = scalar_lea.vmem [#allocation2], %s136
          %s138 = sadd.s32 %s24, %s25
          %s139 = smul.u32 16, %s138
          %s141 = ssub.s32 256, 256
          %142 = vsyncadd %s134, %s141
          %s143 = smul.addr %s139, 16
          %s144 = scalar_lea.hbm %s0, %s143
          %s146 = sshll.u32 %s137, 4
          %s147 = int_to_ptr.vmem [resolvable:$true] %s146
          %149 = dma.hbm_to_vmem [thread:$0]  %s144, 256, %s147, %s134
        $region20: #{tpu_custom_call.1} parent=15 // pred_fallthru
          _
        // Predicated region
        $region21: #{tpu_custom_call.1} parent=15 // pred_check
          %p150 = pneg %p79
        $region22: #{tpu_custom_call.1} parent=15 // pred_check_branch
          %152 = sbr.rel (%p150) target = $region24
        $region23: #{tpu_custom_call.1} parent=15 // pred_region
          %s153 = sand.u32 %s69, 1
          %s154 = scalar_lea.sflag [#allocation6], %s153
          %s155 = sand.u32 %s69, 1
          %s156 = smul.addr %s155, 1024
          %s157 = scalar_lea.vmem [#allocation5], %s156
          %s158 = sadd.s32 %s24, %s25
          %s159 = smul.u32 256, %s158
          %s161 = ssub.s32 16384, 16384
          %162 = vsyncadd %s154, %s161
          %s163 = smul.addr %s159, 64
          %s164 = scalar_lea.hbm %s1, %s163
          %s165 = sshll.u32 %s157, 4
          %s166 = int_to_ptr.vmem [resolvable:$true] %s165
          %171 = dma.hbm_to_vmem [thread:$0]  %s164, 16384, %s166, %s154, 64, 64, 4
        $region24: #{tpu_custom_call.1} parent=15 // pred_fallthru
          _
      $region16: #{tpu_custom_call.1} parent=5 // pred_fallthru
        _
      %p172 = scmp.le.s32.totalorder 1, %s17
      %p173 = scmp.lt.s32.totalorder %s17, 3
      %p174 = pnand %p172, %p173
      %p175 = pneg %p174
      // Predicated region
      $region25: #{tpu_custom_call.1} parent=5 // pred_check
        _
      $region26: #{tpu_custom_call.1} parent=5 // pred_check_branch
        %177 = sbr.rel (%p174) target = $region28
      $region27: #{tpu_custom_call.1} parent=5 // pred_region
        %s178 = ssub.s32 %s17, 1
        %s179 = sand.u32 %s44, 1
        %s180 = scalar_lea.sflag [#allocation3], %s179
        %s181 = sand.u32 %s44, 1
        %s182 = smul.addr %s181, 16
        %s183 = scalar_lea.vmem [#allocation2], %s182
        // Predicated region
        $region29: #{tpu_custom_call.1} parent=27 // pred_check
          %p184 = pneg %p57
        $region30: #{tpu_custom_call.1} parent=27 // pred_check_branch
          %186 = sbr.rel (%p184) target = $region32
        $region31: #{tpu_custom_call.1} parent=27 // pred_region
          %187 = dma.done %s180, 256
        $region32: #{tpu_custom_call.1} parent=27 // pred_fallthru
          _
        %s188 = sand.u32 %s72, 1
        %s189 = scalar_lea.sflag [#allocation6], %s188
        %s190 = sand.u32 %s72, 1
        %s191 = smul.addr %s190, 1024
        %s192 = scalar_lea.vmem [#allocation5], %s191
        // Predicated region
        $region33: #{tpu_custom_call.1} parent=27 // pred_check
          %p193 = pneg %p85
        $region34: #{tpu_custom_call.1} parent=27 // pred_check_branch
          %195 = sbr.rel (%p193) target = $region36
        $region35: #{tpu_custom_call.1} parent=27 // pred_region
          %196 = dma.done %s189, 16384
        $region36: #{tpu_custom_call.1} parent=27 // pred_fallthru
          _
        %s197 = sand.u32 %s44, 1
        %s198 = scalar_lea.sflag [#allocation3], %s197
        %s199 = sand.u32 %s44, 1
        %s200 = smul.addr %s199, 16
        %s201 = scalar_lea.vmem [#allocation2], %s200
        %p202 = pneg %p57
        %p203 = pneg %p54
        %s204 = sand.u32 %s72, 1
        %s205 = scalar_lea.sflag [#allocation6], %s204
        %s206 = sand.u32 %s72, 1
        %s207 = smul.addr %s206, 1024
        %s208 = scalar_lea.vmem [#allocation5], %s207
        %p209 = pneg %p85
        %p210 = pneg %p82
        %p211 = pneg %p111
        %p212 = pneg %p108
        %s213 = sand.u32 %s98, 1
        %s214 = scalar_lea.sflag [#allocation4], %s213
        %s215 = sand.u32 %s98, 1
        %s216 = scalar_lea.vmem [#allocation7], %s215
        %s217 = sadd.s32 %s26, %s27
        %s218 = smul.u32 16, %s217
        %s219 = sadd.s32 %s26, %s27
        %s220 = smul.u32 256, %s219
        %p222 = scmp.eq.s32.totalorder %s27, 0
        // Predicated region
        $region37: #{tpu_custom_call.1} parent=27 // pred_check
          %p223 = pneg %p222
        $region38: #{tpu_custom_call.1} parent=27 // pred_check_branch
          %225 = sbr.rel (%p223) target = $region40
        $region39: #{tpu_custom_call.1} parent=27 // pred_region
          %226 = vst [vmem:[%s216] sm:$0x1] 0.0
        $region40: #{tpu_custom_call.1} parent=27 // pred_fallthru
          _
        %v227 = vld [vmem:[%s216] sm:$0x1]
        %v228 = vld [vmem:[%s183] sm:$0xff]
        %v229 = vld [vmem:[%s183 + $0x8] sm:$0xff]
        %v230 = vld [vmem:[%s192] sm:$0xf]
        %v231 = vld [vmem:[%s192 + $0x4] sm:$0xf]
        %v232 = vld [vmem:[%s192 + $0x8] sm:$0xf]
        %v233 = vld [vmem:[%s192 + $0xc] sm:$0xf]
        %v234 = vld [vmem:[%s192 + $0x10] sm:$0xf]
        %v235 = vld [vmem:[%s192 + $0x14] sm:$0xf]
        %v236 = vld [vmem:[%s192 + $0x18] sm:$0xf]
        %v237 = vld [vmem:[%s192 + $0x1c] sm:$0xf]
        %v238 = vld [vmem:[%s192 + $0x20] sm:$0xf]
        %v239 = vld [vmem:[%s192 + $0x24] sm:$0xf]
        %v240 = vld [vmem:[%s192 + $0x28] sm:$0xf]
        %v241 = vld [vmem:[%s192 + $0x2c] sm:$0xf]
        %v242 = vld [vmem:[%s192 + $0x30] sm:$0xf]
        %v243 = vld [vmem:[%s192 + $0x34] sm:$0xf]
        %v244 = vld [vmem:[%s192 + $0x38] sm:$0xf]
        %v245 = vld [vmem:[%s192 + $0x3c] sm:$0xf]
        %v246 = vld [vmem:[%s192 + $0x40] sm:$0xf]
        %v247 = vld [vmem:[%s192 + $0x44] sm:$0xf]
        %v248 = vld [vmem:[%s192 + $0x48] sm:$0xf]
        %v249 = vld [vmem:[%s192 + $0x4c] sm:$0xf]
        %v250 = vld [vmem:[%s192 + $0x50] sm:$0xf]
        %v251 = vld [vmem:[%s192 + $0x54] sm:$0xf]
        %v252 = vld [vmem:[%s192 + $0x58] sm:$0xf]
        %v253 = vld [vmem:[%s192 + $0x5c] sm:$0xf]
        %v254 = vld [vmem:[%s192 + $0x60] sm:$0xf]
        %v255 = vld [vmem:[%s192 + $0x64] sm:$0xf]
        %v256 = vld [vmem:[%s192 + $0x68] sm:$0xf]
        %v257 = vld [vmem:[%s192 + $0x6c] sm:$0xf]
        %v258 = vld [vmem:[%s192 + $0x70] sm:$0xf]
        %v259 = vld [vmem:[%s192 + $0x74] sm:$0xf]
        %v260 = vld [vmem:[%s192 + $0x78] sm:$0xf]
        %v261 = vld [vmem:[%s192 + $0x7c] sm:$0xf]
        %v262 = vld [vmem:[%s192 + $0x80] sm:$0xf]
        %v263 = vld [vmem:[%s192 + $0x84] sm:$0xf]
        %v264 = vld [vmem:[%s192 + $0x88] sm:$0xf]
        %v265 = vld [vmem:[%s192 + $0x8c] sm:$0xf]
        %v266 = vld [vmem:[%s192 + $0x90] sm:$0xf]
        %v267 = vld [vmem:[%s192 + $0x94] sm:$0xf]
        %v268 = vld [vmem:[%s192 + $0x98] sm:$0xf]
        %v269 = vld [vmem:[%s192 + $0x9c] sm:$0xf]
        %v270 = vld [vmem:[%s192 + $0xa0] sm:$0xf]
        %v271 = vld [vmem:[%s192 + $0xa4] sm:$0xf]
        %v272 = vld [vmem:[%s192 + $0xa8] sm:$0xf]
        %v273 = vld [vmem:[%s192 + $0xac] sm:$0xf]
        %v274 = vld [vmem:[%s192 + $0xb0] sm:$0xf]
        %v275 = vld [vmem:[%s192 + $0xb4] sm:$0xf]
        %v276 = vld [vmem:[%s192 + $0xb8] sm:$0xf]
        %v277 = vld [vmem:[%s192 + $0xbc] sm:$0xf]
        %v278 = vld [vmem:[%s192 + $0xc0] sm:$0xf]
        %v279 = vld [vmem:[%s192 + $0xc4] sm:$0xf]
        %v280 = vld [vmem:[%s192 + $0xc8] sm:$0xf]
        %v281 = vld [vmem:[%s192 + $0xcc] sm:$0xf]
        %v282 = vld [vmem:[%s192 + $0xd0] sm:$0xf]
        %v283 = vld [vmem:[%s192 + $0xd4] sm:$0xf]
        %v284 = vld [vmem:[%s192 + $0xd8] sm:$0xf]
        %v285 = vld [vmem:[%s192 + $0xdc] sm:$0xf]
        %v286 = vld [vmem:[%s192 + $0xe0] sm:$0xf]
        %v287 = vld [vmem:[%s192 + $0xe4] sm:$0xf]
        %v288 = vld [vmem:[%s192 + $0xe8] sm:$0xf]
        %v289 = vld [vmem:[%s192 + $0xec] sm:$0xf]
        %v290 = vld [vmem:[%s192 + $0xf0] sm:$0xf]
        %v291 = vld [vmem:[%s192 + $0xf4] sm:$0xf]
        %v292 = vld [vmem:[%s192 + $0xf8] sm:$0xf]
        %v293 = vld [vmem:[%s192 + $0xfc] sm:$0xf]
        %v294 = vld [vmem:[%s192 + $0x100] sm:$0xf]
        %v295 = vld [vmem:[%s192 + $0x104] sm:$0xf]
        %v296 = vld [vmem:[%s192 + $0x108] sm:$0xf]
        %v297 = vld [vmem:[%s192 + $0x10c] sm:$0xf]
        %v298 = vld [vmem:[%s192 + $0x110] sm:$0xf]
        %v299 = vld [vmem:[%s192 + $0x114] sm:$0xf]
        %v300 = vld [vmem:[%s192 + $0x118] sm:$0xf]
        %v301 = vld [vmem:[%s192 + $0x11c] sm:$0xf]
        %v302 = vld [vmem:[%s192 + $0x120] sm:$0xf]
        %v303 = vld [vmem:[%s192 + $0x124] sm:$0xf]
        %v304 = vld [vmem:[%s192 + $0x128] sm:$0xf]
        %v305 = vld [vmem:[%s192 + $0x12c] sm:$0xf]
        %v306 = vld [vmem:[%s192 + $0x130] sm:$0xf]
        %v307 = vld [vmem:[%s192 + $0x134] sm:$0xf]
        %v308 = vld [vmem:[%s192 + $0x138] sm:$0xf]
        %v309 = vld [vmem:[%s192 + $0x13c] sm:$0xf]
        %v310 = vld [vmem:[%s192 + $0x140] sm:$0xf]
        %v311 = vld [vmem:[%s192 + $0x144] sm:$0xf]
        %v312 = vld [vmem:[%s192 + $0x148] sm:$0xf]
        %v313 = vld [vmem:[%s192 + $0x14c] sm:$0xf]
        %v314 = vld [vmem:[%s192 + $0x150] sm:$0xf]
        %v315 = vld [vmem:[%s192 + $0x154] sm:$0xf]
        %v316 = vld [vmem:[%s192 + $0x158] sm:$0xf]
        %v317 = vld [vmem:[%s192 + $0x15c] sm:$0xf]
        %v318 = vld [vmem:[%s192 + $0x160] sm:$0xf]
        %v319 = vld [vmem:[%s192 + $0x164] sm:$0xf]
        %v320 = vld [vmem:[%s192 + $0x168] sm:$0xf]
        %v321 = vld [vmem:[%s192 + $0x16c] sm:$0xf]
        %v322 = vld [vmem:[%s192 + $0x170] sm:$0xf]
        %v323 = vld [vmem:[%s192 + $0x174] sm:$0xf]
        %v324 = vld [vmem:[%s192 + $0x178] sm:$0xf]
        %v325 = vld [vmem:[%s192 + $0x17c] sm:$0xf]
        %v326 = vld [vmem:[%s192 + $0x180] sm:$0xf]
        %v327 = vld [vmem:[%s192 + $0x184] sm:$0xf]
        %v328 = vld [vmem:[%s192 + $0x188] sm:$0xf]
        %v329 = vld [vmem:[%s192 + $0x18c] sm:$0xf]
        %v330 = vld [vmem:[%s192 + $0x190] sm:$0xf]
        %v331 = vld [vmem:[%s192 + $0x194] sm:$0xf]
        %v332 = vld [vmem:[%s192 + $0x198] sm:$0xf]
        %v333 = vld [vmem:[%s192 + $0x19c] sm:$0xf]
        %v334 = vld [vmem:[%s192 + $0x1a0] sm:$0xf]
        %v335 = vld [vmem:[%s192 + $0x1a4] sm:$0xf]
        %v336 = vld [vmem:[%s192 + $0x1a8] sm:$0xf]
        %v337 = vld [vmem:[%s192 + $0x1ac] sm:$0xf]
        %v338 = vld [vmem:[%s192 + $0x1b0] sm:$0xf]
        %v339 = vld [vmem:[%s192 + $0x1b4] sm:$0xf]
        %v340 = vld [vmem:[%s192 + $0x1b8] sm:$0xf]
        %v341 = vld [vmem:[%s192 + $0x1bc] sm:$0xf]
        %v342 = vld [vmem:[%s192 + $0x1c0] sm:$0xf]
        %v343 = vld [vmem:[%s192 + $0x1c4] sm:$0xf]
        %v344 = vld [vmem:[%s192 + $0x1c8] sm:$0xf]
        %v345 = vld [vmem:[%s192 + $0x1cc] sm:$0xf]
        %v346 = vld [vmem:[%s192 + $0x1d0] sm:$0xf]
        %v347 = vld [vmem:[%s192 + $0x1d4] sm:$0xf]
        %v348 = vld [vmem:[%s192 + $0x1d8] sm:$0xf]
        %v349 = vld [vmem:[%s192 + $0x1dc] sm:$0xf]
        %v350 = vld [vmem:[%s192 + $0x1e0] sm:$0xf]
        %v351 = vld [vmem:[%s192 + $0x1e4] sm:$0xf]
        %v352 = vld [vmem:[%s192 + $0x1e8] sm:$0xf]
        %v353 = vld [vmem:[%s192 + $0x1ec] sm:$0xf]
        %v354 = vld [vmem:[%s192 + $0x1f0] sm:$0xf]
        %v355 = vld [vmem:[%s192 + $0x1f4] sm:$0xf]
        %v356 = vld [vmem:[%s192 + $0x1f8] sm:$0xf]
        %v357 = vld [vmem:[%s192 + $0x1fc] sm:$0xf]
        %v358 = vld [vmem:[%s192 + $0x200] sm:$0xf]
        %v359 = vld [vmem:[%s192 + $0x204] sm:$0xf]
        %v360 = vld [vmem:[%s192 + $0x208] sm:$0xf]
        %v361 = vld [vmem:[%s192 + $0x20c] sm:$0xf]
        %v362 = vld [vmem:[%s192 + $0x210] sm:$0xf]
        %v363 = vld [vmem:[%s192 + $0x214] sm:$0xf]
        %v364 = vld [vmem:[%s192 + $0x218] sm:$0xf]
        %v365 = vld [vmem:[%s192 + $0x21c] sm:$0xf]
        %v366 = vld [vmem:[%s192 + $0x220] sm:$0xf]
        %v367 = vld [vmem:[%s192 + $0x224] sm:$0xf]
        %v368 = vld [vmem:[%s192 + $0x228] sm:$0xf]
        %v369 = vld [vmem:[%s192 + $0x22c] sm:$0xf]
        %v370 = vld [vmem:[%s192 + $0x230] sm:$0xf]
        %v371 = vld [vmem:[%s192 + $0x234] sm:$0xf]
        %v372 = vld [vmem:[%s192 + $0x238] sm:$0xf]
        %v373 = vld [vmem:[%s192 + $0x23c] sm:$0xf]
        %v374 = vld [vmem:[%s192 + $0x240] sm:$0xf]
        %v375 = vld [vmem:[%s192 + $0x244] sm:$0xf]
        %v376 = vld [vmem:[%s192 + $0x248] sm:$0xf]
        %v377 = vld [vmem:[%s192 + $0x24c] sm:$0xf]
        %v378 = vld [vmem:[%s192 + $0x250] sm:$0xf]
        %v379 = vld [vmem:[%s192 + $0x254] sm:$0xf]
        %v380 = vld [vmem:[%s192 + $0x258] sm:$0xf]
        %v381 = vld [vmem:[%s192 + $0x25c] sm:$0xf]
        %v382 = vld [vmem:[%s192 + $0x260] sm:$0xf]
        %v383 = vld [vmem:[%s192 + $0x264] sm:$0xf]
        %v384 = vld [vmem:[%s192 + $0x268] sm:$0xf]
        %v385 = vld [vmem:[%s192 + $0x26c] sm:$0xf]
        %v386 = vld [vmem:[%s192 + $0x270] sm:$0xf]
        %v387 = vld [vmem:[%s192 + $0x274] sm:$0xf]
        %v388 = vld [vmem:[%s192 + $0x278] sm:$0xf]
        %v389 = vld [vmem:[%s192 + $0x27c] sm:$0xf]
        %v390 = vld [vmem:[%s192 + $0x280] sm:$0xf]
        %v391 = vld [vmem:[%s192 + $0x284] sm:$0xf]
        %v392 = vld [vmem:[%s192 + $0x288] sm:$0xf]
        %v393 = vld [vmem:[%s192 + $0x28c] sm:$0xf]
        %v394 = vld [vmem:[%s192 + $0x290] sm:$0xf]
        %v395 = vld [vmem:[%s192 + $0x294] sm:$0xf]
        %v396 = vld [vmem:[%s192 + $0x298] sm:$0xf]
        %v397 = vld [vmem:[%s192 + $0x29c] sm:$0xf]
        %v398 = vld [vmem:[%s192 + $0x2a0] sm:$0xf]
        %v399 = vld [vmem:[%s192 + $0x2a4] sm:$0xf]
        %v400 = vld [vmem:[%s192 + $0x2a8] sm:$0xf]
        %v401 = vld [vmem:[%s192 + $0x2ac] sm:$0xf]
        %v402 = vld [vmem:[%s192 + $0x2b0] sm:$0xf]
        %v403 = vld [vmem:[%s192 + $0x2b4] sm:$0xf]
        %v404 = vld [vmem:[%s192 + $0x2b8] sm:$0xf]
        %v405 = vld [vmem:[%s192 + $0x2bc] sm:$0xf]
        %v406 = vld [vmem:[%s192 + $0x2c0] sm:$0xf]
        %v407 = vld [vmem:[%s192 + $0x2c4] sm:$0xf]
        %v408 = vld [vmem:[%s192 + $0x2c8] sm:$0xf]
        %v409 = vld [vmem:[%s192 + $0x2cc] sm:$0xf]
        %v410 = vld [vmem:[%s192 + $0x2d0] sm:$0xf]
        %v411 = vld [vmem:[%s192 + $0x2d4] sm:$0xf]
        %v412 = vld [vmem:[%s192 + $0x2d8] sm:$0xf]
        %v413 = vld [vmem:[%s192 + $0x2dc] sm:$0xf]
        %v414 = vld [vmem:[%s192 + $0x2e0] sm:$0xf]
        %v415 = vld [vmem:[%s192 + $0x2e4] sm:$0xf]
        %v416 = vld [vmem:[%s192 + $0x2e8] sm:$0xf]
        %v417 = vld [vmem:[%s192 + $0x2ec] sm:$0xf]
        %v418 = vld [vmem:[%s192 + $0x2f0] sm:$0xf]
        %v419 = vld [vmem:[%s192 + $0x2f4] sm:$0xf]
        %v420 = vld [vmem:[%s192 + $0x2f8] sm:$0xf]
        %v421 = vld [vmem:[%s192 + $0x2fc] sm:$0xf]
        %v422 = vld [vmem:[%s192 + $0x300] sm:$0xf]
        %v423 = vld [vmem:[%s192 + $0x304] sm:$0xf]
        %v424 = vld [vmem:[%s192 + $0x308] sm:$0xf]
        %v425 = vld [vmem:[%s192 + $0x30c] sm:$0xf]
        %v426 = vld [vmem:[%s192 + $0x310] sm:$0xf]
        %v427 = vld [vmem:[%s192 + $0x314] sm:$0xf]
        %v428 = vld [vmem:[%s192 + $0x318] sm:$0xf]
        %v429 = vld [vmem:[%s192 + $0x31c] sm:$0xf]
        %v430 = vld [vmem:[%s192 + $0x320] sm:$0xf]
        %v431 = vld [vmem:[%s192 + $0x324] sm:$0xf]
        %v432 = vld [vmem:[%s192 + $0x328] sm:$0xf]
        %v433 = vld [vmem:[%s192 + $0x32c] sm:$0xf]
        %v434 = vld [vmem:[%s192 + $0x330] sm:$0xf]
        %v435 = vld [vmem:[%s192 + $0x334] sm:$0xf]
        %v436 = vld [vmem:[%s192 + $0x338] sm:$0xf]
        %v437 = vld [vmem:[%s192 + $0x33c] sm:$0xf]
        %v438 = vld [vmem:[%s192 + $0x340] sm:$0xf]
        %v439 = vld [vmem:[%s192 + $0x344] sm:$0xf]
        %v440 = vld [vmem:[%s192 + $0x348] sm:$0xf]
        %v441 = vld [vmem:[%s192 + $0x34c] sm:$0xf]
        %v442 = vld [vmem:[%s192 + $0x350] sm:$0xf]
        %v443 = vld [vmem:[%s192 + $0x354] sm:$0xf]
        %v444 = vld [vmem:[%s192 + $0x358] sm:$0xf]
        %v445 = vld [vmem:[%s192 + $0x35c] sm:$0xf]
        %v446 = vld [vmem:[%s192 + $0x360] sm:$0xf]
        %v447 = vld [vmem:[%s192 + $0x364] sm:$0xf]
        %v448 = vld [vmem:[%s192 + $0x368] sm:$0xf]
        %v449 = vld [vmem:[%s192 + $0x36c] sm:$0xf]
        %v450 = vld [vmem:[%s192 + $0x370] sm:$0xf]
        %v451 = vld [vmem:[%s192 + $0x374] sm:$0xf]
        %v452 = vld [vmem:[%s192 + $0x378] sm:$0xf]
        %v453 = vld [vmem:[%s192 + $0x37c] sm:$0xf]
        %v454 = vld [vmem:[%s192 + $0x380] sm:$0xf]
        %v455 = vld [vmem:[%s192 + $0x384] sm:$0xf]
        %v456 = vld [vmem:[%s192 + $0x388] sm:$0xf]
        %v457 = vld [vmem:[%s192 + $0x38c] sm:$0xf]
        %v458 = vld [vmem:[%s192 + $0x390] sm:$0xf]
        %v459 = vld [vmem:[%s192 + $0x394] sm:$0xf]
        %v460 = vld [vmem:[%s192 + $0x398] sm:$0xf]
        %v461 = vld [vmem:[%s192 + $0x39c] sm:$0xf]
        %v462 = vld [vmem:[%s192 + $0x3a0] sm:$0xf]
        %v463 = vld [vmem:[%s192 + $0x3a4] sm:$0xf]
        %v464 = vld [vmem:[%s192 + $0x3a8] sm:$0xf]
        %v465 = vld [vmem:[%s192 + $0x3ac] sm:$0xf]
        %v466 = vld [vmem:[%s192 + $0x3b0] sm:$0xf]
        %v467 = vld [vmem:[%s192 + $0x3b4] sm:$0xf]
        %v468 = vld [vmem:[%s192 + $0x3b8] sm:$0xf]
        %v469 = vld [vmem:[%s192 + $0x3bc] sm:$0xf]
        %v470 = vld [vmem:[%s192 + $0x3c0] sm:$0xf]
        %v471 = vld [vmem:[%s192 + $0x3c4] sm:$0xf]
        %v472 = vld [vmem:[%s192 + $0x3c8] sm:$0xf]
        %v473 = vld [vmem:[%s192 + $0x3cc] sm:$0xf]
        %v474 = vld [vmem:[%s192 + $0x3d0] sm:$0xf]
        %v475 = vld [vmem:[%s192 + $0x3d4] sm:$0xf]
        %v476 = vld [vmem:[%s192 + $0x3d8] sm:$0xf]
        %v477 = vld [vmem:[%s192 + $0x3dc] sm:$0xf]
        %v478 = vld [vmem:[%s192 + $0x3e0] sm:$0xf]
        %v479 = vld [vmem:[%s192 + $0x3e4] sm:$0xf]
        %v480 = vld [vmem:[%s192 + $0x3e8] sm:$0xf]
        %v481 = vld [vmem:[%s192 + $0x3ec] sm:$0xf]
        %v482 = vld [vmem:[%s192 + $0x3f0] sm:$0xf]
        %v483 = vld [vmem:[%s192 + $0x3f4] sm:$0xf]
        %v484 = vld [vmem:[%s192 + $0x3f8] sm:$0xf]
        %v485 = vld [vmem:[%s192 + $0x3fc] sm:$0xf]
        %v488 = vcombine.high %v228, %v228
        %v490 = vunpack.c.l.s4 1966171168
        %v491 = vunpack.c.0.s8 %v490
        %v492 = vlaneseq
        %v493 = vshrl.u32 %v492, 7
        %v494 = vsub.s32 %v491, %v493
        %v495 = vrot.slane %v228, %v494
        %v497 = vunpack.c.l.s4 1966171168
        %v498 = vunpack.c.0.s8 %v497
        %v499 = vlaneseq
        %v500 = vshrl.u32 %v499, 7
        %v501 = vsub.s32 %v498, %v500
        %v502 = vrot.slane %v488, %v501
        %v503 = vcombine.high %v495, %v495
        %v504 = vcombine.high %v502, %v502
        %v506 = vunpack.c.l.s4 1966171168
        %v507 = vunpack.c.0.s8 %v506
        %v508 = vlaneseq
        %v509 = vshrl.u32 %v508, 7
        %v510 = vsub.s32 %v507, %v509
        %v511 = vrot.slane %v495, %v510
        %v513 = vunpack.c.l.s4 1966171168
        %v514 = vunpack.c.0.s8 %v513
        %v515 = vlaneseq
        %v516 = vshrl.u32 %v515, 7
        %v517 = vsub.s32 %v514, %v516
        %v518 = vrot.slane %v502, %v517
        %v520 = vunpack.c.l.s4 1966171168
        %v521 = vunpack.c.0.s8 %v520
        %v522 = vlaneseq
        %v523 = vshrl.u32 %v522, 7
        %v524 = vsub.s32 %v521, %v523
        %v525 = vrot.slane %v503, %v524
        %v527 = vunpack.c.l.s4 1966171168
        %v528 = vunpack.c.0.s8 %v527
        %v529 = vlaneseq
        %v530 = vshrl.u32 %v529, 7
        %v531 = vsub.s32 %v528, %v530
        %v532 = vrot.slane %v504, %v531
        %v533 = vcombine.high %v511, %v511
        %v534 = vcombine.high %v518, %v518
        %v535 = vcombine.high %v525, %v525
        %v536 = vcombine.high %v532, %v532
        %v537 = vcombine.high %v229, %v229
        %v539 = vunpack.c.l.s4 1966171168
        %v540 = vunpack.c.0.s8 %v539
        %v541 = vlaneseq
        %v542 = vshrl.u32 %v541, 7
        %v543 = vsub.s32 %v540, %v542
        %v544 = vrot.slane %v229, %v543
        %v546 = vunpack.c.l.s4 1966171168
        %v547 = vunpack.c.0.s8 %v546
        %v548 = vlaneseq
        %v549 = vshrl.u32 %v548, 7
        %v550 = vsub.s32 %v547, %v549
        %v551 = vrot.slane %v537, %v550
        %v552 = vcombine.high %v544, %v544
        %v553 = vcombine.high %v551, %v551
        %v555 = vunpack.c.l.s4 1966171168
        %v556 = vunpack.c.0.s8 %v555
        %v557 = vlaneseq
        %v558 = vshrl.u32 %v557, 7
        %v559 = vsub.s32 %v556, %v558
        %v560 = vrot.slane %v544, %v559
        %v562 = vunpack.c.l.s4 1966171168
        %v563 = vunpack.c.0.s8 %v562
        %v564 = vlaneseq
        %v565 = vshrl.u32 %v564, 7
        %v566 = vsub.s32 %v563, %v565
        %v567 = vrot.slane %v551, %v566
        %v569 = vunpack.c.l.s4 1966171168
        %v570 = vunpack.c.0.s8 %v569
        %v571 = vlaneseq
        %v572 = vshrl.u32 %v571, 7
        %v573 = vsub.s32 %v570, %v572
        %v574 = vrot.slane %v552, %v573
        %v576 = vunpack.c.l.s4 1966171168
        %v577 = vunpack.c.0.s8 %v576
        %v578 = vlaneseq
        %v579 = vshrl.u32 %v578, 7
        %v580 = vsub.s32 %v577, %v579
        %v581 = vrot.slane %v553, %v580
        %v582 = vcombine.high %v560, %v560
        %v583 = vcombine.high %v567, %v567
        %v584 = vcombine.high %v574, %v574
        %v585 = vcombine.high %v581, %v581
        %v858 = vunpack.c.l.b16 %v230
        %v859 = vunpack.c.l.b16 %v231
        %v860 = vunpack.c.l.b16 %v232
        %v861 = vunpack.c.l.b16 %v233
        %v862 = vunpack.c.l.b16 %v234
        %v863 = vunpack.c.l.b16 %v235
        %v864 = vunpack.c.l.b16 %v236
        %v865 = vunpack.c.l.b16 %v237
        %v866 = vunpack.c.l.b16 %v238
        %v867 = vunpack.c.l.b16 %v239
        %v868 = vunpack.c.l.b16 %v240
        %v869 = vunpack.c.l.b16 %v241
        %v870 = vunpack.c.l.b16 %v242
        %v871 = vunpack.c.l.b16 %v243
        %v872 = vunpack.c.l.b16 %v244
        %v873 = vunpack.c.l.b16 %v245
        %v874 = vunpack.c.l.b16 %v246
        %v875 = vunpack.c.l.b16 %v247
        %v876 = vunpack.c.l.b16 %v248
        %v877 = vunpack.c.l.b16 %v249
        %v878 = vunpack.c.l.b16 %v250
        %v879 = vunpack.c.l.b16 %v251
        %v880 = vunpack.c.l.b16 %v252
        %v881 = vunpack.c.l.b16 %v253
        %v882 = vunpack.c.l.b16 %v254
        %v883 = vunpack.c.l.b16 %v255
        %v884 = vunpack.c.l.b16 %v256
        %v885 = vunpack.c.l.b16 %v257
        %v886 = vunpack.c.l.b16 %v258
        %v887 = vunpack.c.l.b16 %v259
        %v888 = vunpack.c.l.b16 %v260
        %v889 = vunpack.c.l.b16 %v261
        %v890 = vunpack.c.l.b16 %v262
        %v891 = vunpack.c.l.b16 %v263
        %v892 = vunpack.c.l.b16 %v264
        %v893 = vunpack.c.l.b16 %v265
        %v894 = vunpack.c.l.b16 %v266
        %v895 = vunpack.c.l.b16 %v267
        %v896 = vunpack.c.l.b16 %v268
        %v897 = vunpack.c.l.b16 %v269
        %v898 = vunpack.c.l.b16 %v270
        %v899 = vunpack.c.l.b16 %v271
        %v900 = vunpack.c.l.b16 %v272
        %v901 = vunpack.c.l.b16 %v273
        %v902 = vunpack.c.l.b16 %v274
        %v903 = vunpack.c.l.b16 %v275
        %v904 = vunpack.c.l.b16 %v276
        %v905 = vunpack.c.l.b16 %v277
        %v906 = vunpack.c.l.b16 %v278
        %v907 = vunpack.c.l.b16 %v279
        %v908 = vunpack.c.l.b16 %v280
        %v909 = vunpack.c.l.b16 %v281
        %v910 = vunpack.c.l.b16 %v282
        %v911 = vunpack.c.l.b16 %v283
        %v912 = vunpack.c.l.b16 %v284
        %v913 = vunpack.c.l.b16 %v285
        %v914 = vunpack.c.l.b16 %v286
        %v915 = vunpack.c.l.b16 %v287
        %v916 = vunpack.c.l.b16 %v288
        %v917 = vunpack.c.l.b16 %v289
        %v918 = vunpack.c.l.b16 %v290
        %v919 = vunpack.c.l.b16 %v291
        %v920 = vunpack.c.l.b16 %v292
        %v921 = vunpack.c.l.b16 %v293
        %v922 = vunpack.c.l.b16 %v294
        %v923 = vunpack.c.l.b16 %v295
        %v924 = vunpack.c.l.b16 %v296
        %v925 = vunpack.c.l.b16 %v297
        %v926 = vunpack.c.l.b16 %v298
        %v927 = vunpack.c.l.b16 %v299
        %v928 = vunpack.c.l.b16 %v300
        %v929 = vunpack.c.l.b16 %v301
        %v930 = vunpack.c.l.b16 %v302
        %v931 = vunpack.c.l.b16 %v303
        %v932 = vunpack.c.l.b16 %v304
        %v933 = vunpack.c.l.b16 %v305
        %v934 = vunpack.c.l.b16 %v306
        %v935 = vunpack.c.l.b16 %v307
        %v936 = vunpack.c.l.b16 %v308
        %v937 = vunpack.c.l.b16 %v309
        %v938 = vunpack.c.l.b16 %v310
        %v939 = vunpack.c.l.b16 %v311
        %v940 = vunpack.c.l.b16 %v312
        %v941 = vunpack.c.l.b16 %v313
        %v942 = vunpack.c.l.b16 %v314
        %v943 = vunpack.c.l.b16 %v315
        %v944 = vunpack.c.l.b16 %v316
        %v945 = vunpack.c.l.b16 %v317
        %v946 = vunpack.c.l.b16 %v318
        %v947 = vunpack.c.l.b16 %v319
        %v948 = vunpack.c.l.b16 %v320
        %v949 = vunpack.c.l.b16 %v321
        %v950 = vunpack.c.l.b16 %v322
        %v951 = vunpack.c.l.b16 %v323
        %v952 = vunpack.c.l.b16 %v324
        %v953 = vunpack.c.l.b16 %v325
        %v954 = vunpack.c.l.b16 %v326
        %v955 = vunpack.c.l.b16 %v327
        %v956 = vunpack.c.l.b16 %v328
        %v957 = vunpack.c.l.b16 %v329
        %v958 = vunpack.c.l.b16 %v330
        %v959 = vunpack.c.l.b16 %v331
        %v960 = vunpack.c.l.b16 %v332
        %v961 = vunpack.c.l.b16 %v333
        %v962 = vunpack.c.l.b16 %v334
        %v963 = vunpack.c.l.b16 %v335
        %v964 = vunpack.c.l.b16 %v336
        %v965 = vunpack.c.l.b16 %v337
        %v966 = vunpack.c.l.b16 %v338
        %v967 = vunpack.c.l.b16 %v339
        %v968 = vunpack.c.l.b16 %v340
        %v969 = vunpack.c.l.b16 %v341
        %v970 = vunpack.c.l.b16 %v342
        %v971 = vunpack.c.l.b16 %v343
        %v972 = vunpack.c.l.b16 %v344
        %v973 = vunpack.c.l.b16 %v345
        %v974 = vunpack.c.l.b16 %v346
        %v975 = vunpack.c.l.b16 %v347
        %v976 = vunpack.c.l.b16 %v348
        %v977 = vunpack.c.l.b16 %v349
        %v978 = vunpack.c.l.b16 %v350
        %v979 = vunpack.c.l.b16 %v351
        %v980 = vunpack.c.l.b16 %v352
        %v981 = vunpack.c.l.b16 %v353
        %v982 = vunpack.c.l.b16 %v354
        %v983 = vunpack.c.l.b16 %v355
        %v984 = vunpack.c.l.b16 %v356
        %v985 = vunpack.c.l.b16 %v357
        %v986 = vunpack.c.l.b16 %v358
        %v987 = vunpack.c.l.b16 %v359
        %v988 = vunpack.c.l.b16 %v360
        %v989 = vunpack.c.l.b16 %v361
        %v990 = vunpack.c.l.b16 %v362
        %v991 = vunpack.c.l.b16 %v363
        %v992 = vunpack.c.l.b16 %v364
        %v993 = vunpack.c.l.b16 %v365
        %v994 = vunpack.c.l.b16 %v366
        %v995 = vunpack.c.l.b16 %v367
        %v996 = vunpack.c.l.b16 %v368
        %v997 = vunpack.c.l.b16 %v369
        %v998 = vunpack.c.l.b16 %v370
        %v999 = vunpack.c.l.b16 %v371
        %v1000 = vunpack.c.l.b16 %v372
        %v1001 = vunpack.c.l.b16 %v373
        %v1002 = vunpack.c.l.b16 %v374
        %v1003 = vunpack.c.l.b16 %v375
        %v1004 = vunpack.c.l.b16 %v376
        %v1005 = vunpack.c.l.b16 %v377
        %v1006 = vunpack.c.l.b16 %v378
        %v1007 = vunpack.c.l.b16 %v379
        %v1008 = vunpack.c.l.b16 %v380
        %v1009 = vunpack.c.l.b16 %v381
        %v1010 = vunpack.c.l.b16 %v382
        %v1011 = vunpack.c.l.b16 %v383
        %v1012 = vunpack.c.l.b16 %v384
        %v1013 = vunpack.c.l.b16 %v385
        %v1014 = vunpack.c.l.b16 %v386
        %v1015 = vunpack.c.l.b16 %v387
        %v1016 = vunpack.c.l.b16 %v388
        %v1017 = vunpack.c.l.b16 %v389
        %v1018 = vunpack.c.l.b16 %v390
        %v1019 = vunpack.c.l.b16 %v391
        %v1020 = vunpack.c.l.b16 %v392
        %v1021 = vunpack.c.l.b16 %v393
        %v1022 = vunpack.c.l.b16 %v394
        %v1023 = vunpack.c.l.b16 %v395
        %v1024 = vunpack.c.l.b16 %v396
        %v1025 = vunpack.c.l.b16 %v397
        %v1026 = vunpack.c.l.b16 %v398
        %v1027 = vunpack.c.l.b16 %v399
        %v1028 = vunpack.c.l.b16 %v400
        %v1029 = vunpack.c.l.b16 %v401
        %v1030 = vunpack.c.l.b16 %v402
        %v1031 = vunpack.c.l.b16 %v403
        %v1032 = vunpack.c.l.b16 %v404
        %v1033 = vunpack.c.l.b16 %v405
        %v1034 = vunpack.c.l.b16 %v406
        %v1035 = vunpack.c.l.b16 %v407
        %v1036 = vunpack.c.l.b16 %v408
        %v1037 = vunpack.c.l.b16 %v409
        %v1038 = vunpack.c.l.b16 %v410
        %v1039 = vunpack.c.l.b16 %v411
        %v1040 = vunpack.c.l.b16 %v412
        %v1041 = vunpack.c.l.b16 %v413
        %v1042 = vunpack.c.l.b16 %v414
        %v1043 = vunpack.c.l.b16 %v415
        %v1044 = vunpack.c.l.b16 %v416
        %v1045 = vunpack.c.l.b16 %v417
        %v1046 = vunpack.c.l.b16 %v418
        %v1047 = vunpack.c.l.b16 %v419
        %v1048 = vunpack.c.l.b16 %v420
        %v1049 = vunpack.c.l.b16 %v421
        %v1050 = vunpack.c.l.b16 %v422
        %v1051 = vunpack.c.l.b16 %v423
        %v1052 = vunpack.c.l.b16 %v424
        %v1053 = vunpack.c.l.b16 %v425
        %v1054 = vunpack.c.l.b16 %v426
        %v1055 = vunpack.c.l.b16 %v427
        %v1056 = vunpack.c.l.b16 %v428
        %v1057 = vunpack.c.l.b16 %v429
        %v1058 = vunpack.c.l.b16 %v430
        %v1059 = vunpack.c.l.b16 %v431
        %v1060 = vunpack.c.l.b16 %v432
        %v1061 = vunpack.c.l.b16 %v433
        %v1062 = vunpack.c.l.b16 %v434
        %v1063 = vunpack.c.l.b16 %v435
        %v1064 = vunpack.c.l.b16 %v436
        %v1065 = vunpack.c.l.b16 %v437
        %v1066 = vunpack.c.l.b16 %v438
        %v1067 = vunpack.c.l.b16 %v439
        %v1068 = vunpack.c.l.b16 %v440
        %v1069 = vunpack.c.l.b16 %v441
        %v1070 = vunpack.c.l.b16 %v442
        %v1071 = vunpack.c.l.b16 %v443
        %v1072 = vunpack.c.l.b16 %v444
        %v1073 = vunpack.c.l.b16 %v445
        %v1074 = vunpack.c.l.b16 %v446
        %v1075 = vunpack.c.l.b16 %v447
        %v1076 = vunpack.c.l.b16 %v448
        %v1077 = vunpack.c.l.b16 %v449
        %v1078 = vunpack.c.l.b16 %v450
        %v1079 = vunpack.c.l.b16 %v451
        %v1080 = vunpack.c.l.b16 %v452
        %v1081 = vunpack.c.l.b16 %v453
        %v1082 = vunpack.c.l.b16 %v454
        %v1083 = vunpack.c.l.b16 %v455
        %v1084 = vunpack.c.l.b16 %v456
        %v1085 = vunpack.c.l.b16 %v457
        %v1086 = vunpack.c.l.b16 %v458
        %v1087 = vunpack.c.l.b16 %v459
        %v1088 = vunpack.c.l.b16 %v460
        %v1089 = vunpack.c.l.b16 %v461
        %v1090 = vunpack.c.l.b16 %v462
        %v1091 = vunpack.c.l.b16 %v463
        %v1092 = vunpack.c.l.b16 %v464
        %v1093 = vunpack.c.l.b16 %v465
        %v1094 = vunpack.c.l.b16 %v466
        %v1095 = vunpack.c.l.b16 %v467
        %v1096 = vunpack.c.l.b16 %v468
        %v1097 = vunpack.c.l.b16 %v469
        %v1098 = vunpack.c.l.b16 %v470
        %v1099 = vunpack.c.l.b16 %v471
        %v1100 = vunpack.c.l.b16 %v472
        %v1101 = vunpack.c.l.b16 %v473
        %v1102 = vunpack.c.l.b16 %v474
        %v1103 = vunpack.c.l.b16 %v475
        %v1104 = vunpack.c.l.b16 %v476
        %v1105 = vunpack.c.l.b16 %v477
        %v1106 = vunpack.c.l.b16 %v478
        %v1107 = vunpack.c.l.b16 %v479
        %v1108 = vunpack.c.l.b16 %v480
        %v1109 = vunpack.c.l.b16 %v481
        %v1110 = vunpack.c.l.b16 %v482
        %v1111 = vunpack.c.l.b16 %v483
        %v1112 = vunpack.c.l.b16 %v484
        %v1113 = vunpack.c.l.b16 %v485
        %v1114 = vpack.c.b16 %v859, %v858
        %v1115 = vpack.c.b16 %v861, %v860
        %v1116 = vpack.c.b16 %v863, %v862
        %v1117 = vpack.c.b16 %v865, %v864
        %v1118 = vpack.c.b16 %v867, %v866
        %v1119 = vpack.c.b16 %v869, %v868
        %v1120 = vpack.c.b16 %v871, %v870
        %v1121 = vpack.c.b16 %v873, %v872
        %v1122 = vpack.c.b16 %v875, %v874
        %v1123 = vpack.c.b16 %v877, %v876
        %v1124 = vpack.c.b16 %v879, %v878
        %v1125 = vpack.c.b16 %v881, %v880
        %v1126 = vpack.c.b16 %v883, %v882
        %v1127 = vpack.c.b16 %v885, %v884
        %v1128 = vpack.c.b16 %v887, %v886
        %v1129 = vpack.c.b16 %v889, %v888
        %v1130 = vpack.c.b16 %v891, %v890
        %v1131 = vpack.c.b16 %v893, %v892
        %v1132 = vpack.c.b16 %v895, %v894
        %v1133 = vpack.c.b16 %v897, %v896
        %v1134 = vpack.c.b16 %v899, %v898
        %v1135 = vpack.c.b16 %v901, %v900
        %v1136 = vpack.c.b16 %v903, %v902
        %v1137 = vpack.c.b16 %v905, %v904
        %v1138 = vpack.c.b16 %v907, %v906
        %v1139 = vpack.c.b16 %v909, %v908
        %v1140 = vpack.c.b16 %v911, %v910
        %v1141 = vpack.c.b16 %v913, %v912
        %v1142 = vpack.c.b16 %v915, %v914
        %v1143 = vpack.c.b16 %v917, %v916
        %v1144 = vpack.c.b16 %v919, %v918
        %v1145 = vpack.c.b16 %v921, %v920
        %v1146 = vpack.c.b16 %v923, %v922
        %v1147 = vpack.c.b16 %v925, %v924
        %v1148 = vpack.c.b16 %v927, %v926
        %v1149 = vpack.c.b16 %v929, %v928
        %v1150 = vpack.c.b16 %v931, %v930
        %v1151 = vpack.c.b16 %v933, %v932
        %v1152 = vpack.c.b16 %v935, %v934
        %v1153 = vpack.c.b16 %v937, %v936
        %v1154 = vpack.c.b16 %v939, %v938
        %v1155 = vpack.c.b16 %v941, %v940
        %v1156 = vpack.c.b16 %v943, %v942
        %v1157 = vpack.c.b16 %v945, %v944
        %v1158 = vpack.c.b16 %v947, %v946
        %v1159 = vpack.c.b16 %v949, %v948
        %v1160 = vpack.c.b16 %v951, %v950
        %v1161 = vpack.c.b16 %v953, %v952
        %v1162 = vpack.c.b16 %v955, %v954
        %v1163 = vpack.c.b16 %v957, %v956
        %v1164 = vpack.c.b16 %v959, %v958
        %v1165 = vpack.c.b16 %v961, %v960
        %v1166 = vpack.c.b16 %v963, %v962
        %v1167 = vpack.c.b16 %v965, %v964
        %v1168 = vpack.c.b16 %v967, %v966
        %v1169 = vpack.c.b16 %v969, %v968
        %v1170 = vpack.c.b16 %v971, %v970
        %v1171 = vpack.c.b16 %v973, %v972
        %v1172 = vpack.c.b16 %v975, %v974
        %v1173 = vpack.c.b16 %v977, %v976
        %v1174 = vpack.c.b16 %v979, %v978
        %v1175 = vpack.c.b16 %v981, %v980
        %v1176 = vpack.c.b16 %v983, %v982
        %v1177 = vpack.c.b16 %v985, %v984
        %v1178 = vpack.c.b16 %v987, %v986
        %v1179 = vpack.c.b16 %v989, %v988
        %v1180 = vpack.c.b16 %v991, %v990
        %v1181 = vpack.c.b16 %v993, %v992
        %v1182 = vpack.c.b16 %v995, %v994
        %v1183 = vpack.c.b16 %v997, %v996
        %v1184 = vpack.c.b16 %v999, %v998
        %v1185 = vpack.c.b16 %v1001, %v1000
        %v1186 = vpack.c.b16 %v1003, %v1002
        %v1187 = vpack.c.b16 %v1005, %v1004
        %v1188 = vpack.c.b16 %v1007, %v1006
        %v1189 = vpack.c.b16 %v1009, %v1008
        %v1190 = vpack.c.b16 %v1011, %v1010
        %v1191 = vpack.c.b16 %v1013, %v1012
        %v1192 = vpack.c.b16 %v1015, %v1014
        %v1193 = vpack.c.b16 %v1017, %v1016
        %v1194 = vpack.c.b16 %v1019, %v1018
        %v1195 = vpack.c.b16 %v1021, %v1020
        %v1196 = vpack.c.b16 %v1023, %v1022
        %v1197 = vpack.c.b16 %v1025, %v1024
        %v1198 = vpack.c.b16 %v1027, %v1026
        %v1199 = vpack.c.b16 %v1029, %v1028
        %v1200 = vpack.c.b16 %v1031, %v1030
        %v1201 = vpack.c.b16 %v1033, %v1032
        %v1202 = vpack.c.b16 %v1035, %v1034
        %v1203 = vpack.c.b16 %v1037, %v1036
        %v1204 = vpack.c.b16 %v1039, %v1038
        %v1205 = vpack.c.b16 %v1041, %v1040
        %v1206 = vpack.c.b16 %v1043, %v1042
        %v1207 = vpack.c.b16 %v1045, %v1044
        %v1208 = vpack.c.b16 %v1047, %v1046
        %v1209 = vpack.c.b16 %v1049, %v1048
        %v1210 = vpack.c.b16 %v1051, %v1050
        %v1211 = vpack.c.b16 %v1053, %v1052
        %v1212 = vpack.c.b16 %v1055, %v1054
        %v1213 = vpack.c.b16 %v1057, %v1056
        %v1214 = vpack.c.b16 %v1059, %v1058
        %v1215 = vpack.c.b16 %v1061, %v1060
        %v1216 = vpack.c.b16 %v1063, %v1062
        %v1217 = vpack.c.b16 %v1065, %v1064
        %v1218 = vpack.c.b16 %v1067, %v1066
        %v1219 = vpack.c.b16 %v1069, %v1068
        %v1220 = vpack.c.b16 %v1071, %v1070
        %v1221 = vpack.c.b16 %v1073, %v1072
        %v1222 = vpack.c.b16 %v1075, %v1074
        %v1223 = vpack.c.b16 %v1077, %v1076
        %v1224 = vpack.c.b16 %v1079, %v1078
        %v1225 = vpack.c.b16 %v1081, %v1080
        %v1226 = vpack.c.b16 %v1083, %v1082
        %v1227 = vpack.c.b16 %v1085, %v1084
        %v1228 = vpack.c.b16 %v1087, %v1086
        %v1229 = vpack.c.b16 %v1089, %v1088
        %v1230 = vpack.c.b16 %v1091, %v1090
        %v1231 = vpack.c.b16 %v1093, %v1092
        %v1232 = vpack.c.b16 %v1095, %v1094
        %v1233 = vpack.c.b16 %v1097, %v1096
        %v1234 = vpack.c.b16 %v1099, %v1098
        %v1235 = vpack.c.b16 %v1101, %v1100
        %v1236 = vpack.c.b16 %v1103, %v1102
        %v1237 = vpack.c.b16 %v1105, %v1104
        %v1238 = vpack.c.b16 %v1107, %v1106
        %v1239 = vpack.c.b16 %v1109, %v1108
        %v1240 = vpack.c.b16 %v1111, %v1110
        %v1241 = vpack.c.b16 %v1113, %v1112
        %1370 = vmatprep.subr.bf16.mxu0 0
        %1371 = vmatpush1.bf16.msra.mxu0 %v1114
        %1372 = vmatprep.subr.bf16.mxu0 0
        %1373 = vmatpush1.bf16.msra.mxu0 %v1115
        %1374 = vmatprep.subr.bf16.mxu0 0
        %1375 = vmatpush1.bf16.msra.mxu0 %v1116
        %1376 = vmatprep.subr.bf16.mxu0 0
        %1377 = vmatpush1.bf16.msra.mxu0 %v1117
        %1378 = vmatprep.subr.bf16.mxu0 0
        %1379 = vmatpush1.bf16.msra.mxu0 %v1118
        %1380 = vmatprep.subr.bf16.mxu0 0
        %1381 = vmatpush1.bf16.msra.mxu0 %v1119
        %1382 = vmatprep.subr.bf16.mxu0 0
        %1383 = vmatpush1.bf16.msra.mxu0 %v1120
        %1384 = vmatprep.subr.bf16.mxu0 0
        %1385 = vmatpush1.bf16.msra.mxu0 %v1121
        %1386 = vmatprep.subr.bf16.mxu0 0
        %1387 = vmatpush1.bf16.msra.mxu0 %v1122
        %1388 = vmatprep.subr.bf16.mxu0 0
        %1389 = vmatpush1.bf16.msra.mxu0 %v1123
        %1390 = vmatprep.subr.bf16.mxu0 0
        %1391 = vmatpush1.bf16.msra.mxu0 %v1124
        %1392 = vmatprep.subr.bf16.mxu0 0
        %1393 = vmatpush1.bf16.msra.mxu0 %v1125
        %1394 = vmatprep.subr.bf16.mxu0 0
        %1395 = vmatpush1.bf16.msra.mxu0 %v1126
        %1396 = vmatprep.subr.bf16.mxu0 0
        %1397 = vmatpush1.bf16.msra.mxu0 %v1127
        %1398 = vmatprep.subr.bf16.mxu0 0
        %1399 = vmatpush1.bf16.msra.mxu0 %v1128
        %1400 = vmatprep.subr.bf16.mxu0 0
        %1401 = vmatpush1.bf16.msra.mxu0 %v1129
        %1402 = vmatprep.mubr.bf16.mxu0 %v525
        %1403 = vmatmul.mubr.bf16.gmra.mrb[0].mxu0 %v511
        %v1404 = vpop.f32.mrb[0].mxu0
        %v1405 = vadd.f32 0.0, %v1404
        %v1406 = vpop.f32.mrb[0].mxu0
        %v1407 = vpop.f32.mrb[0].mxu0
        %v1408 = vpop.f32.mrb[0].mxu0
        %1409 = vdwg.mxu0
        %1410 = vmatprep.subr.bf16.mxu0 0
        %1411 = vmatpush1.bf16.msra.mxu0 %v1130
        %1412 = vmatprep.subr.bf16.mxu0 0
        %1413 = vmatpush1.bf16.msra.mxu0 %v1131
        %1414 = vmatprep.subr.bf16.mxu0 0
        %1415 = vmatpush1.bf16.msra.mxu0 %v1132
        %1416 = vmatprep.subr.bf16.mxu0 0
        %1417 = vmatpush1.bf16.msra.mxu0 %v1133
        %1418 = vmatprep.subr.bf16.mxu0 0
        %1419 = vmatpush1.bf16.msra.mxu0 %v1134
        %1420 = vmatprep.subr.bf16.mxu0 0
        %1421 = vmatpush1.bf16.msra.mxu0 %v1135
        %1422 = vmatprep.subr.bf16.mxu0 0
        %1423 = vmatpush1.bf16.msra.mxu0 %v1136
        %1424 = vmatprep.subr.bf16.mxu0 0
        %1425 = vmatpush1.bf16.msra.mxu0 %v1137
        %1426 = vmatprep.subr.bf16.mxu0 0
        %1427 = vmatpush1.bf16.msra.mxu0 %v1138
        %1428 = vmatprep.subr.bf16.mxu0 0
        %1429 = vmatpush1.bf16.msra.mxu0 %v1139
        %1430 = vmatprep.subr.bf16.mxu0 0
        %1431 = vmatpush1.bf16.msra.mxu0 %v1140
        %1432 = vmatprep.subr.bf16.mxu0 0
        %1433 = vmatpush1.bf16.msra.mxu0 %v1141
        %1434 = vmatprep.subr.bf16.mxu0 0
        %1435 = vmatpush1.bf16.msra.mxu0 %v1142
        %1436 = vmatprep.subr.bf16.mxu0 0
        %1437 = vmatpush1.bf16.msra.mxu0 %v1143
        %1438 = vmatprep.subr.bf16.mxu0 0
        %1439 = vmatpush1.bf16.msra.mxu0 %v1144
        %1440 = vmatprep.subr.bf16.mxu0 0
        %1441 = vmatpush1.bf16.msra.mxu0 %v1145
        %1442 = vmatprep.mubr.bf16.mxu0 %v535
        %1443 = vmatmul.mubr.bf16.gmra.mrb[0].mxu0 %v533
        %v1444 = vpop.f32.mrb[0].mxu0
        %v1445 = vadd.f32 %v1405, %v1444
        %v1446 = vpop.f32.mrb[0].mxu0
        %v1447 = vpop.f32.mrb[0].mxu0
        %v1448 = vpop.f32.mrb[0].mxu0
        %1449 = vdwg.mxu0
        %1450 = vmatprep.subr.bf16.mxu0 0
        %1451 = vmatpush1.bf16.msra.mxu0 %v1146
        %1452 = vmatprep.subr.bf16.mxu0 0
        %1453 = vmatpush1.bf16.msra.mxu0 %v1147
        %1454 = vmatprep.subr.bf16.mxu0 0
        %1455 = vmatpush1.bf16.msra.mxu0 %v1148
        %1456 = vmatprep.subr.bf16.mxu0 0
        %1457 = vmatpush1.bf16.msra.mxu0 %v1149
        %1458 = vmatprep.subr.bf16.mxu0 0
        %1459 = vmatpush1.bf16.msra.mxu0 %v1150
        %1460 = vmatprep.subr.bf16.mxu0 0
        %1461 = vmatpush1.bf16.msra.mxu0 %v1151
        %1462 = vmatprep.subr.bf16.mxu0 0
        %1463 = vmatpush1.bf16.msra.mxu0 %v1152
        %1464 = vmatprep.subr.bf16.mxu0 0
        %1465 = vmatpush1.bf16.msra.mxu0 %v1153
        %1466 = vmatprep.subr.bf16.mxu0 0
        %1467 = vmatpush1.bf16.msra.mxu0 %v1154
        %1468 = vmatprep.subr.bf16.mxu0 0
        %1469 = vmatpush1.bf16.msra.mxu0 %v1155
        %1470 = vmatprep.subr.bf16.mxu0 0
        %1471 = vmatpush1.bf16.msra.mxu0 %v1156
        %1472 = vmatprep.subr.bf16.mxu0 0
        %1473 = vmatpush1.bf16.msra.mxu0 %v1157
        %1474 = vmatprep.subr.bf16.mxu0 0
        %1475 = vmatpush1.bf16.msra.mxu0 %v1158
        %1476 = vmatprep.subr.bf16.mxu0 0
        %1477 = vmatpush1.bf16.msra.mxu0 %v1159
        %1478 = vmatprep.subr.bf16.mxu0 0
        %1479 = vmatpush1.bf16.msra.mxu0 %v1160
        %1480 = vmatprep.subr.bf16.mxu0 0
        %1481 = vmatpush1.bf16.msra.mxu0 %v1161
        %1482 = vmatprep.mubr.bf16.mxu0 %v532
        %1483 = vmatmul.mubr.bf16.gmra.mrb[0].mxu0 %v518
        %v1484 = vpop.f32.mrb[0].mxu0
        %v1485 = vadd.f32 %v1445, %v1484
        %v1486 = vpop.f32.mrb[0].mxu0
        %v1487 = vpop.f32.mrb[0].mxu0
        %v1488 = vpop.f32.mrb[0].mxu0
        %1489 = vdwg.mxu0
        %1490 = vmatprep.subr.bf16.mxu0 0
        %1491 = vmatpush1.bf16.msra.mxu0 %v1162
        %1492 = vmatprep.subr.bf16.mxu0 0
        %1493 = vmatpush1.bf16.msra.mxu0 %v1163
        %1494 = vmatprep.subr.bf16.mxu0 0
        %1495 = vmatpush1.bf16.msra.mxu0 %v1164
        %1496 = vmatprep.subr.bf16.mxu0 0
        %1497 = vmatpush1.bf16.msra.mxu0 %v1165
        %1498 = vmatprep.subr.bf16.mxu0 0
        %1499 = vmatpush1.bf16.msra.mxu0 %v1166
        %1500 = vmatprep.subr.bf16.mxu0 0
        %1501 = vmatpush1.bf16.msra.mxu0 %v1167
        %1502 = vmatprep.subr.bf16.mxu0 0
        %1503 = vmatpush1.bf16.msra.mxu0 %v1168
        %1504 = vmatprep.subr.bf16.mxu0 0
        %1505 = vmatpush1.bf16.msra.mxu0 %v1169
        %1506 = vmatprep.subr.bf16.mxu0 0
        %1507 = vmatpush1.bf16.msra.mxu0 %v1170
        %1508 = vmatprep.subr.bf16.mxu0 0
        %1509 = vmatpush1.bf16.msra.mxu0 %v1171
        %1510 = vmatprep.subr.bf16.mxu0 0
        %1511 = vmatpush1.bf16.msra.mxu0 %v1172
        %1512 = vmatprep.subr.bf16.mxu0 0
        %1513 = vmatpush1.bf16.msra.mxu0 %v1173
        %1514 = vmatprep.subr.bf16.mxu0 0
        %1515 = vmatpush1.bf16.msra.mxu0 %v1174
        %1516 = vmatprep.subr.bf16.mxu0 0
        %1517 = vmatpush1.bf16.msra.mxu0 %v1175
        %1518 = vmatprep.subr.bf16.mxu0 0
        %1519 = vmatpush1.bf16.msra.mxu0 %v1176
        %1520 = vmatprep.subr.bf16.mxu0 0
        %1521 = vmatpush1.bf16.msra.mxu0 %v1177
        %1522 = vmatprep.mubr.bf16.mxu0 %v536
        %1523 = vmatmul.mubr.bf16.gmra.mrb[0].mxu0 %v534
        %v1524 = vpop.f32.mrb[0].mxu0
        %v1525 = vadd.f32 %v1485, %v1524
        %v1526 = vpop.f32.mrb[0].mxu0
        %v1527 = vpop.f32.mrb[0].mxu0
        %v1528 = vpop.f32.mrb[0].mxu0
        %1529 = vdwg.mxu0
        %1530 = vmatprep.subr.bf16.mxu0 0
        %1531 = vmatpush1.bf16.msra.mxu0 %v1178
        %1532 = vmatprep.subr.bf16.mxu0 0
        %1533 = vmatpush1.bf16.msra.mxu0 %v1179
        %1534 = vmatprep.subr.bf16.mxu0 0
        %1535 = vmatpush1.bf16.msra.mxu0 %v1180
        %1536 = vmatprep.subr.bf16.mxu0 0
        %1537 = vmatpush1.bf16.msra.mxu0 %v1181
        %1538 = vmatprep.subr.bf16.mxu0 0
        %1539 = vmatpush1.bf16.msra.mxu0 %v1182
        %1540 = vmatprep.subr.bf16.mxu0 0
        %1541 = vmatpush1.bf16.msra.mxu0 %v1183
        %1542 = vmatprep.subr.bf16.mxu0 0
        %1543 = vmatpush1.bf16.msra.mxu0 %v1184
        %1544 = vmatprep.subr.bf16.mxu0 0
        %1545 = vmatpush1.bf16.msra.mxu0 %v1185
        %1546 = vmatprep.subr.bf16.mxu0 0
        %1547 = vmatpush1.bf16.msra.mxu0 %v1186
        %1548 = vmatprep.subr.bf16.mxu0 0
        %1549 = vmatpush1.bf16.msra.mxu0 %v1187
        %1550 = vmatprep.subr.bf16.mxu0 0
        %1551 = vmatpush1.bf16.msra.mxu0 %v1188
        %1552 = vmatprep.subr.bf16.mxu0 0
        %1553 = vmatpush1.bf16.msra.mxu0 %v1189
        %1554 = vmatprep.subr.bf16.mxu0 0
        %1555 = vmatpush1.bf16.msra.mxu0 %v1190
        %1556 = vmatprep.subr.bf16.mxu0 0
        %1557 = vmatpush1.bf16.msra.mxu0 %v1191
        %1558 = vmatprep.subr.bf16.mxu0 0
        %1559 = vmatpush1.bf16.msra.mxu0 %v1192
        %1560 = vmatprep.subr.bf16.mxu0 0
        %1561 = vmatpush1.bf16.msra.mxu0 %v1193
        %1562 = vmatprep.mubr.bf16.mxu0 %v574
        %1563 = vmatmul.mubr.bf16.gmra.mrb[0].mxu0 %v560
        %v1564 = vpop.f32.mrb[0].mxu0
        %v1565 = vadd.f32 %v1525, %v1564
        %v1566 = vpop.f32.mrb[0].mxu0
        %v1567 = vpop.f32.mrb[0].mxu0
        %v1568 = vpop.f32.mrb[0].mxu0
        %1569 = vdwg.mxu0
        %1570 = vmatprep.subr.bf16.mxu0 0
        %1571 = vmatpush1.bf16.msra.mxu0 %v1194
        %1572 = vmatprep.subr.bf16.mxu0 0
        %1573 = vmatpush1.bf16.msra.mxu0 %v1195
        %1574 = vmatprep.subr.bf16.mxu0 0
        %1575 = vmatpush1.bf16.msra.mxu0 %v1196
        %1576 = vmatprep.subr.bf16.mxu0 0
        %1577 = vmatpush1.bf16.msra.mxu0 %v1197
        %1578 = vmatprep.subr.bf16.mxu0 0
        %1579 = vmatpush1.bf16.msra.mxu0 %v1198
        %1580 = vmatprep.subr.bf16.mxu0 0
        %1581 = vmatpush1.bf16.msra.mxu0 %v1199
        %1582 = vmatprep.subr.bf16.mxu0 0
        %1583 = vmatpush1.bf16.msra.mxu0 %v1200
        %1584 = vmatprep.subr.bf16.mxu0 0
        %1585 = vmatpush1.bf16.msra.mxu0 %v1201
        %1586 = vmatprep.subr.bf16.mxu0 0
        %1587 = vmatpush1.bf16.msra.mxu0 %v1202
        %1588 = vmatprep.subr.bf16.mxu0 0
        %1589 = vmatpush1.bf16.msra.mxu0 %v1203
        %1590 = vmatprep.subr.bf16.mxu0 0
        %1591 = vmatpush1.bf16.msra.mxu0 %v1204
        %1592 = vmatprep.subr.bf16.mxu0 0
        %1593 = vmatpush1.bf16.msra.mxu0 %v1205
        %1594 = vmatprep.subr.bf16.mxu0 0
        %1595 = vmatpush1.bf16.msra.mxu0 %v1206
        %1596 = vmatprep.subr.bf16.mxu0 0
        %1597 = vmatpush1.bf16.msra.mxu0 %v1207
        %1598 = vmatprep.subr.bf16.mxu0 0
        %1599 = vmatpush1.bf16.msra.mxu0 %v1208
        %1600 = vmatprep.subr.bf16.mxu0 0
        %1601 = vmatpush1.bf16.msra.mxu0 %v1209
        %1602 = vmatprep.mubr.bf16.mxu0 %v584
        %1603 = vmatmul.mubr.bf16.gmra.mrb[0].mxu0 %v582
        %v1604 = vpop.f32.mrb[0].mxu0
        %v1605 = vadd.f32 %v1565, %v1604
        %v1606 = vpop.f32.mrb[0].mxu0
        %v1607 = vpop.f32.mrb[0].mxu0
        %v1608 = vpop.f32.mrb[0].mxu0
        %1609 = vdwg.mxu0
        %1610 = vmatprep.subr.bf16.mxu0 0
        %1611 = vmatpush1.bf16.msra.mxu0 %v1210
        %1612 = vmatprep.subr.bf16.mxu0 0
        %1613 = vmatpush1.bf16.msra.mxu0 %v1211
        %1614 = vmatprep.subr.bf16.mxu0 0
        %1615 = vmatpush1.bf16.msra.mxu0 %v1212
        %1616 = vmatprep.subr.bf16.mxu0 0
        %1617 = vmatpush1.bf16.msra.mxu0 %v1213
        %1618 = vmatprep.subr.bf16.mxu0 0
        %1619 = vmatpush1.bf16.msra.mxu0 %v1214
        %1620 = vmatprep.subr.bf16.mxu0 0
        %1621 = vmatpush1.bf16.msra.mxu0 %v1215
        %1622 = vmatprep.subr.bf16.mxu0 0
        %1623 = vmatpush1.bf16.msra.mxu0 %v1216
        %1624 = vmatprep.subr.bf16.mxu0 0
        %1625 = vmatpush1.bf16.msra.mxu0 %v1217
        %1626 = vmatprep.subr.bf16.mxu0 0
        %1627 = vmatpush1.bf16.msra.mxu0 %v1218
        %1628 = vmatprep.subr.bf16.mxu0 0
        %1629 = vmatpush1.bf16.msra.mxu0 %v1219
        %1630 = vmatprep.subr.bf16.mxu0 0
        %1631 = vmatpush1.bf16.msra.mxu0 %v1220
        %1632 = vmatprep.subr.bf16.mxu0 0
        %1633 = vmatpush1.bf16.msra.mxu0 %v1221
        %1634 = vmatprep.subr.bf16.mxu0 0
        %1635 = vmatpush1.bf16.msra.mxu0 %v1222
        %1636 = vmatprep.subr.bf16.mxu0 0
        %1637 = vmatpush1.bf16.msra.mxu0 %v1223
        %1638 = vmatprep.subr.bf16.mxu0 0
        %1639 = vmatpush1.bf16.msra.mxu0 %v1224
        %1640 = vmatprep.subr.bf16.mxu0 0
        %1641 = vmatpush1.bf16.msra.mxu0 %v1225
        %1642 = vmatprep.mubr.bf16.mxu0 %v581
        %1643 = vmatmul.mubr.bf16.gmra.mrb[0].mxu0 %v567
        %v1644 = vpop.f32.mrb[0].mxu0
        %v1645 = vadd.f32 %v1605, %v1644
        %v1646 = vpop.f32.mrb[0].mxu0
        %v1647 = vpop.f32.mrb[0].mxu0
        %v1648 = vpop.f32.mrb[0].mxu0
        %1649 = vdwg.mxu0
        %1650 = vmatprep.subr.bf16.mxu0 0
        %1651 = vmatpush1.bf16.msra.mxu0 %v1226
        %1652 = vmatprep.subr.bf16.mxu0 0
        %1653 = vmatpush1.bf16.msra.mxu0 %v1227
        %1654 = vmatprep.subr.bf16.mxu0 0
        %1655 = vmatpush1.bf16.msra.mxu0 %v1228
        %1656 = vmatprep.subr.bf16.mxu0 0
        %1657 = vmatpush1.bf16.msra.mxu0 %v1229
        %1658 = vmatprep.subr.bf16.mxu0 0
        %1659 = vmatpush1.bf16.msra.mxu0 %v1230
        %1660 = vmatprep.subr.bf16.mxu0 0
        %1661 = vmatpush1.bf16.msra.mxu0 %v1231
        %1662 = vmatprep.subr.bf16.mxu0 0
        %1663 = vmatpush1.bf16.msra.mxu0 %v1232
        %1664 = vmatprep.subr.bf16.mxu0 0
        %1665 = vmatpush1.bf16.msra.mxu0 %v1233
        %1666 = vmatprep.subr.bf16.mxu0 0
        %1667 = vmatpush1.bf16.msra.mxu0 %v1234
        %1668 = vmatprep.subr.bf16.mxu0 0
        %1669 = vmatpush1.bf16.msra.mxu0 %v1235
        %1670 = vmatprep.subr.bf16.mxu0 0
        %1671 = vmatpush1.bf16.msra.mxu0 %v1236
        %1672 = vmatprep.subr.bf16.mxu0 0
        %1673 = vmatpush1.bf16.msra.mxu0 %v1237
        %1674 = vmatprep.subr.bf16.mxu0 0
        %1675 = vmatpush1.bf16.msra.mxu0 %v1238
        %1676 = vmatprep.subr.bf16.mxu0 0
        %1677 = vmatpush1.bf16.msra.mxu0 %v1239
        %1678 = vmatprep.subr.bf16.mxu0 0
        %1679 = vmatpush1.bf16.msra.mxu0 %v1240
        %1680 = vmatprep.subr.bf16.mxu0 0
        %1681 = vmatpush1.bf16.msra.mxu0 %v1241
        %1682 = vmatprep.mubr.bf16.mxu0 %v585
        %1683 = vmatmul.mubr.bf16.gmra.mrb[0].mxu0 %v583
        %v1684 = vpop.f32.mrb[0].mxu0
        %v1685 = vadd.f32 %v1645, %v1684
        %v1686 = vpop.f32.mrb[0].mxu0
        %v1687 = vpop.f32.mrb[0].mxu0
        %v1688 = vpop.f32.mrb[0].mxu0
        %1689 = vdwg.mxu0
        %v1690 = vadd.f32 %v227, %v1685
        %1691 = vst [vmem:[%s216] sm:$0x1] %v1690
        %s1692 = sand.u32 %s98, 1
        %s1693 = scalar_lea.sflag [#allocation4], %s1692
        %s1694 = sand.u32 %s98, 1
        %s1695 = scalar_lea.vmem [#allocation7], %s1694
        // Predicated region
        $region41: #{tpu_custom_call.1} parent=27 // pred_check
          %p1696 = pneg %p108
        $region42: #{tpu_custom_call.1} parent=27 // pred_check_branch
          %1698 = sbr.rel (%p1696) target = $region44
        $region43: #{tpu_custom_call.1} parent=27 // pred_region
          %s1700 = ssub.s32 16, 16
          %1701 = vsyncadd %s1693, %s1700
          %s1702 = smul.addr %s26, 16
          %s1703 = scalar_lea.hbm %s2, %s1702
          %s1705 = sshll.u32 %s1695, 4
          %s1706 = int_to_ptr.vmem [resolvable:$true] %s1705
          %1708 = dma.vmem_to_hbm [thread:$0]  %s1706, 16, %s1703, %s1693
        $region44: #{tpu_custom_call.1} parent=27 // pred_fallthru
          _
      $region28: #{tpu_custom_call.1} parent=5 // pred_fallthru
        _
      %p1709 = scmp.le.s32.totalorder 2, %s17
      // Predicated region
      $region45: #{tpu_custom_call.1} parent=5 // pred_check
        %p1710 = pneg %p1709
      $region46: #{tpu_custom_call.1} parent=5 // pred_check_branch
        %1712 = sbr.rel (%p1710) target = $region48
      $region47: #{tpu_custom_call.1} parent=5 // pred_region
        %s1713 = ssub.s32 %s17, 2
        // Predicated region
        $region49: #{tpu_custom_call.1} parent=47 // pred_check
          %p1714 = pneg %p114
        $region50: #{tpu_custom_call.1} parent=47 // pred_check_branch
          %1716 = sbr.rel (%p1714) target = $region52
        $region51: #{tpu_custom_call.1} parent=47 // pred_region
          %s1717 = sand.u32 %s99, 1
          %s1718 = scalar_lea.sflag [#allocation4], %s1717
          %s1719 = sand.u32 %s99, 1
          %s1720 = scalar_lea.vmem [#allocation7], %s1719
          %1721 = dma.done %s1718, 16
        $region52: #{tpu_custom_call.1} parent=47 // pred_fallthru
          _
      $region48: #{tpu_custom_call.1} parent=5 // pred_fallthru
        _
    $region6: #{tpu_custom_call.1} parent=1 // loop_footer
      %s21 = sadd.s32 1, %s17
    $region7: #{tpu_custom_call.1} parent=1 // loop_footer_branch
      %16 = sbr.rel target = $region3
    $region8: #{tpu_custom_call.1} parent=1 // loop_exit
      _
    %1722 = vsyncpa [#allocation3], 1
    %s1723 = scalar_lea.sflag [#allocation3], 1
    %1724 = vsyncpa %s1723, 1
    %1725 = vsyncpa [#allocation6], 1
    %s1726 = scalar_lea.sflag [#allocation6], 1
    %1727 = vsyncpa %s1726, 1
    %1728 = vsyncpa [#allocation4], 1
    %s1729 = scalar_lea.sflag [#allocation4], 1
    %1730 = vsyncpa %s1729, 1

</llo_original>
